<compile_context>
chip_gen: v7x
topology: tpu7x:2x2x1
jax: 0.10.0
libtpu: 0.0.40
codegen_flags: <defaults>
</compile_context>

<pallas_src>
import functools
import math
from typing import NamedTuple

import jax
import jax.numpy as jnp
from jax.experimental import pallas as pl
from jax.experimental.pallas import tpu as pltpu


def _align8(v: int) -> int:
    return -(-v // 8) * 8


def _align128(v: int) -> int:
    return -(-v // 128) * 128


class GCNParams(NamedTuple):
    pslab: jax.Array   # packed parameter slab, f32 (rows, slab_w)
    nfeat: int
    nhid: int
    nclass: int
    max_len: int
    out_dim: int
    out_pad: int
    slab_w: int
    off_w1: int
    off_w2: int
    off_wfc: int


# --------------------------------------------------------------------------- #
# Kernel
# --------------------------------------------------------------------------- #
def _gcn_kernel(x_ref, adj_ref, p_ref, out_ref, *,
                nhid, nclass, off_w1, off_w2, off_wfc):
    # x_ref:   (bb, N, nfeat)      adj_ref: (bb, N, N)
    # p_ref:   (rows, slab_w)      packed params (biases + W1 + W2 + Wfc)
    # out_ref: (bb, out_pad)       lane-dense padded fc output
    bb, n_nodes, nfeat = x_ref.shape
    out_pad = out_ref.shape[1]

    # Static slices into the single packed-parameter slab (one DMA for all
    # weights/biases; every weight block starts at an 8-aligned sublane row).
    w1 = p_ref[off_w1:off_w1 + nfeat, 0:nhid]                       # (nfeat, nhid)
    w2 = p_ref[off_w2:off_w2 + nhid, 0:nclass]                      # (nhid, nclass)
    wfc = p_ref[off_wfc:off_wfc + n_nodes * nclass, 0:out_pad]      # (N*nclass, out_pad)
    b1 = p_ref[0:1, 0:nhid]                                         # (1, nhid)
    b2 = p_ref[1:2, 0:nclass]                                       # (1, nclass)
    bfc = p_ref[2:3, 0:out_pad]                                     # (1, out_pad)

    adj = adj_ref[...]                                              # reused by both layers

    # --- GraphConvolution 1 + ReLU (shared-weight matmul on flattened batch) ---
    x2d = x_ref[...].reshape(bb * n_nodes, nfeat)                   # sublane-only reshape
    s1 = jnp.dot(x2d, w1, preferred_element_type=jnp.float32)       # (bb*N, nhid)
    h1 = jnp.einsum('bnm,bmh->bnh', adj, s1.reshape(bb, n_nodes, nhid),
                    preferred_element_type=jnp.float32) + b1        # (bb, N, nhid)
    h1 = jnp.maximum(h1, 0.0)

    # --- dropout: identity at inference ---

    # --- GraphConvolution 2 ---
    s2 = jnp.dot(h1.reshape(bb * n_nodes, nhid), w2,
                 preferred_element_type=jnp.float32)                # (bb*N, nclass)
    h2 = jnp.einsum('bnm,bmc->bnc', adj, s2.reshape(bb, n_nodes, nclass),
                    preferred_element_type=jnp.float32) + b2        # (bb, N, nclass)

    # --- flatten (torch .view(B, N*nclass)) + single lane-dense fc matmul ---
    flat = h2.reshape(bb, n_nodes * nclass)                         # (bb, N*nclass)
    out_ref[...] = jnp.dot(flat, wfc,
                           preferred_element_type=jnp.float32) + bfc


# --------------------------------------------------------------------------- #
# Wrapper
# --------------------------------------------------------------------------- #
def _pick_batch_block(batch: int, per_graph_bytes: int) -> int:
    """Pick the per-grid-step batch block.

    Keeps the per-step working set well under every generation's scoped-VMEM
    default (v7x only has 64 MiB physical / 32 MiB scoped), and once the batch
    is large enough splits it into >=2 sublane-aligned blocks so the
    ("parallel",) grid axis can be sharded across v7x's two TensorCores.
    Tiny batches stay gridless-equivalent (grid=(1,)) — no per-step overhead.
    """
    budget = 4 << 20  # bytes of activations per batch block (conservative)
    if batch < 16 or batch % 8:
        return batch
    bb = batch
    while bb == batch or bb * per_graph_bytes > budget:
        half = bb // 2
        if half % 8 or batch % half:
            break
        bb = half
    return bb


def gcn_forward(x, adj, params: GCNParams):
    """x: (B, N, nfeat) f32, adj: (B, N, N) f32 -> (B, out_dim) f32."""
    B, N, nfeat = x.shape
    assert N == params.max_len and nfeat == params.nfeat
    assert adj.shape == (B, N, N)

    per_graph_bytes = 4 * (N * nfeat + N * N + params.out_pad
                           + 2 * N * (params.nhid + params.nclass))
    bb = _pick_batch_block(B, per_graph_bytes)
    grid = (B // bb,)

    kernel = functools.partial(
        _gcn_kernel,
        nhid=params.nhid, nclass=params.nclass,
        off_w1=params.off_w1, off_w2=params.off_w2, off_wfc=params.off_wfc)

    out = pl.pallas_call(
        kernel,
        out_shape=jax.ShapeDtypeStruct((B, params.out_pad), jnp.float32),
        grid_spec=pltpu.PrefetchScalarGridSpec(
            num_scalar_prefetch=0,
            grid=grid,
            in_specs=[
                pl.BlockSpec((bb, N, nfeat), lambda i: (i, 0, 0)),
                pl.BlockSpec((bb, N, N), lambda i: (i, 0, 0)),
                # Constant index map: the packed slab is DMA'd once and reused.
                pl.BlockSpec(params.pslab.shape, lambda i: (0, 0)),
            ],
            out_specs=pl.BlockSpec((bb, params.out_pad), lambda i: (i, 0)),
        ),
        compiler_params=pltpu.CompilerParams(
            dimension_semantics=("parallel",),   # megacore sharding on v7x
            # Explicit cap: equals the v6e/v7x scoped default, raises v5e's
            # 16 MiB default, stays well under v7x's 64 MiB physical VMEM.
            vmem_limit_bytes=32 * 1024 * 1024,
        ),
    )(x, adj, params.pslab)
    return out[:, :params.out_dim]


# --------------------------------------------------------------------------- #
# Parameter init (all padding / packing done ONCE here, not per forward call)
# --------------------------------------------------------------------------- #
def init_params(key, nfeat, nhid, nclass, max_len, out_dim=50) -> GCNParams:
    """Mirrors the PyTorch module's reset_parameters / nn.Linear default init
    (uniform +-1/sqrt(fan)) and packs everything into one lane-dense slab."""
    k1, k2, k3, k4, k5, k6 = jax.random.split(key, 6)

    stdv1 = 1.0 / math.sqrt(nhid)
    w1 = jax.random.uniform(k1, (nfeat, nhid), jnp.float32, -stdv1, stdv1)
    b1 = jax.random.uniform(k2, (nhid,), jnp.float32, -stdv1, stdv1)

    stdv2 = 1.0 / math.sqrt(nclass)
    w2 = jax.random.uniform(k3, (nhid, nclass), jnp.float32, -stdv2, stdv2)
    b2 = jax.random.uniform(k4, (nclass,), jnp.float32, -stdv2, stdv2)

    fan_in = nclass * max_len
    stdv3 = 1.0 / math.sqrt(fan_in)
    # fc weight stored pre-transposed: (nclass*max_len, out_dim) so fc(x) = x @ wfc_t + bfc
    wfc_t = jax.random.uniform(k5, (fan_in, out_dim), jnp.float32, -stdv3, stdv3)
    bfc = jax.random.uniform(k6, (out_dim,), jnp.float32, -stdv3, stdv3)

    out_pad = _align128(out_dim)
    slab_w = _align128(max(nhid, nclass, out_dim))
    off_w1 = 8                              # rows 0..2 hold the three biases
    off_w2 = off_w1 + _align8(nfeat)
    off_wfc = off_w2 + _align8(nhid)
    rows = _align8(off_wfc + fan_in)

    pslab = jnp.zeros((rows, slab_w), jnp.float32)
    pslab = pslab.at[0, :nhid].set(b1)
    pslab = pslab.at[1, :nclass].set(b2)
    pslab = pslab.at[2, :out_dim].set(bfc)
    pslab = pslab.at[off_w1:off_w1 + nfeat, :nhid].set(w1)
    pslab = pslab.at[off_w2:off_w2 + nhid, :nclass].set(w2)
    pslab = pslab.at[off_wfc:off_wfc + fan_in, :out_dim].set(wfc_t)

    return GCNParams(pslab=pslab, nfeat=nfeat, nhid=nhid, nclass=nclass,
                     max_len=max_len, out_dim=out_dim, out_pad=out_pad,
                     slab_w=slab_w, off_w1=off_w1, off_w2=off_w2, off_wfc=off_wfc)


# --------------------------------------------------------------------------- #
# Pure-JAX reference (unpacks from the slab, which also validates the packing)
# --------------------------------------------------------------------------- #
def gcn_reference(x, adj, params: GCNParams):
    p = params.pslab
    nfeat, nhid, nclass = params.nfeat, params.nhid, params.nclass
    fan_in = params.nclass * params.max_len
    w1 = p[params.off_w1:params.off_w1 + nfeat, :nhid]
    w2 = p[params.off_w2:params.off_w2 + nhid, :nclass]
    wfc = p[params.off_wfc:params.off_wfc + fan_in, :params.out_dim]
    b1 = p[0, :nhid]
    b2 = p[1, :nclass]
    bfc = p[2, :params.out_dim]

    h1 = jnp.maximum(jnp.einsum('bnm,bmf->bnf', adj, x @ w1) + b1, 0.0)
    h2 = jnp.einsum('bnm,bmf->bnf', adj, h1 @ w2) + b2
    flat = h2.reshape(h2.shape[0], -1)
    return flat @ wfc + bfc


if __name__ == "__main__":
    # Small shapes consistent with the module:
    #   B=2, max_len (graph nodes / seq) N=8, nfeat=16, nhid=32, nclass=4
    B, N, nfeat, nhid, nclass = 2, 8, 16, 32, 4

    key = jax.random.PRNGKey(0)
    kx, ka, kp = jax.random.split(key, 3)

    x = jax.random.normal(kx, (B, N, nfeat), jnp.float32)
    # symmetric, row-normalized-ish adjacency
    a = jax.random.uniform(ka, (B, N, N), jnp.float32)
    adj = (a + jnp.swapaxes(a, 1, 2)) * 0.5
    adj = adj / jnp.sum(adj, axis=-1, keepdims=True)

    params = init_params(kp, nfeat, nhid, nclass, max_len=N, out_dim=50)

    out = gcn_forward(x, adj, params)
    jax.block_until_ready(out)

    ref = gcn_reference(x, adj, params)
    assert out.shape == (B, 50)
    assert jnp.allclose(out, ref, atol=1e-4, rtol=1e-4), "mismatch vs reference"

    print("KERNEL_OK")
</pallas_src>

<mosaic_0001>
module attributes {stable_mosaic.version = 11 : i64} {
  func.func @_gcn_kernel(%arg0: i32, %arg1: memref<2x8x16xf32, #tpu.memory_space<vmem>>, %arg2: memref<2x8x8xf32, #tpu.memory_space<vmem>>, %arg3: memref<88x128xf32, #tpu.memory_space<vmem>>, %arg4: memref<2x128xf32, #tpu.memory_space<vmem>>) attributes {dimension_semantics = [#tpu.dimension_semantics<parallel>], iteration_bounds = array<i64: 1>, scalar_prefetch = 0 : i64, scratch_operands = 0 : i64, tpu.core_type = #tpu.core_type<tc>, window_params = [{transform_indices = @transform_0, window_bounds = array<i64: 2, 8, 16>}, {transform_indices = @transform_1, window_bounds = array<i64: 2, 8, 8>}, {pipeline_mode = #tpu.pipeline_mode<synchronous>, transform_indices = @transform_2, window_bounds = array<i64: 88, 128>}, {transform_indices = @transform_3, window_bounds = array<i64: 2, 128>}]} {
    %c8 = arith.constant 8 : index
    %c0 = arith.constant 0 : index
    %0 = vector.load %arg3[%c8, %c0] : memref<88x128xf32, #tpu.memory_space<vmem>>, vector<16x32xf32>
    %c24 = arith.constant 24 : index
    %c0_0 = arith.constant 0 : index
    %1 = vector.load %arg3[%c24, %c0_0] : memref<88x128xf32, #tpu.memory_space<vmem>>, vector<32x4xf32>
    %c56 = arith.constant 56 : index
    %c0_1 = arith.constant 0 : index
    %2 = vector.load %arg3[%c56, %c0_1] : memref<88x128xf32, #tpu.memory_space<vmem>>, vector<32x128xf32>
    %c0_2 = arith.constant 0 : index
    %c0_3 = arith.constant 0 : index
    %3 = vector.load %arg3[%c0_2, %c0_3] : memref<88x128xf32, #tpu.memory_space<vmem>>, vector<1x32xf32>
    %c1 = arith.constant 1 : index
    %c0_4 = arith.constant 0 : index
    %4 = vector.load %arg3[%c1, %c0_4] : memref<88x128xf32, #tpu.memory_space<vmem>>, vector<1x4xf32>
    %c2 = arith.constant 2 : index
    %c0_5 = arith.constant 0 : index
    %5 = vector.load %arg3[%c2, %c0_5] : memref<88x128xf32, #tpu.memory_space<vmem>>, vector<1x128xf32>
    %c0_6 = arith.constant 0 : index
    %c0_7 = arith.constant 0 : index
    %c0_8 = arith.constant 0 : index
    %6 = vector.load %arg2[%c0_6, %c0_7, %c0_8] : memref<2x8x8xf32, #tpu.memory_space<vmem>>, vector<2x8x8xf32>
    %c0_9 = arith.constant 0 : index
    %c0_10 = arith.constant 0 : index
    %c0_11 = arith.constant 0 : index
    %7 = vector.load %arg1[%c0_9, %c0_10, %c0_11] : memref<2x8x16xf32, #tpu.memory_space<vmem>>, vector<2x8x16xf32>
    %8 = vector.shape_cast %7 : vector<2x8x16xf32> to vector<16x16xf32>
    %cst = arith.constant dense<0.000000e+00> : vector<16x32xf32>
    %9 = tpu.matmul %8, %0, %cst {dimension_numbers = #tpu.dot_dimension_numbers<[1], [0], [0], [1], [0, 0, 1, 1], [], []>} : vector<16x16xf32>, vector<16x32xf32>, vector<16x32xf32> -> vector<16x32xf32>
    %10 = vector.shape_cast %9 : vector<16x32xf32> to vector<2x8x32xf32>
    "tpu.trace_start"() <{level = 10 : i32, message = "bnm,bmh->bnh"}> : () -> ()
    %cst_12 = arith.constant dense<0.000000e+00> : vector<2x8x32xf32>
    %11 = tpu.matmul %6, %10, %cst_12 {dimension_numbers = #tpu.dot_dimension_numbers<[2], [1], [1], [2], [0, 0, 0, 1, 1, 2], [0], [0]>} : vector<2x8x8xf32>, vector<2x8x32xf32>, vector<2x8x32xf32> -> vector<2x8x32xf32>
    "tpu.trace_stop"() : () -> ()
    %12 = vector.shape_cast %3 : vector<1x32xf32> to vector<1x1x32xf32>
    %13 = vector.broadcast %12 : vector<1x1x32xf32> to vector<2x8x32xf32>
    %14 = arith.addf %11, %13 : vector<2x8x32xf32>
    %cst_13 = arith.constant 0.000000e+00 : f32
    %15 = vector.broadcast %cst_13 : f32 to vector<2x8x32xf32>
    %16 = arith.maximumf %14, %15 : vector<2x8x32xf32>
    %17 = vector.shape_cast %16 : vector<2x8x32xf32> to vector<16x32xf32>
    %cst_14 = arith.constant dense<0.000000e+00> : vector<16x4xf32>
    %18 = tpu.matmul %17, %1, %cst_14 {dimension_numbers = #tpu.dot_dimension_numbers<[1], [0], [0], [1], [0, 0, 1, 1], [], []>} : vector<16x32xf32>, vector<32x4xf32>, vector<16x4xf32> -> vector<16x4xf32>
    %19 = vector.shape_cast %18 : vector<16x4xf32> to vector<2x8x4xf32>
    "tpu.trace_start"() <{level = 10 : i32, message = "bnm,bmc->bnc"}> : () -> ()
    %cst_15 = arith.constant dense<0.000000e+00> : vector<2x8x4xf32>
    %20 = tpu.matmul %6, %19, %cst_15 {dimension_numbers = #tpu.dot_dimension_numbers<[2], [1], [1], [2], [0, 0, 0, 1, 1, 2], [0], [0]>} : vector<2x8x8xf32>, vector<2x8x4xf32>, vector<2x8x4xf32> -> vector<2x8x4xf32>
    "tpu.trace_stop"() : () -> ()
    %21 = vector.shape_cast %4 : vector<1x4xf32> to vector<1x1x4xf32>
    %22 = vector.broadcast %21 : vector<1x1x4xf32> to vector<2x8x4xf32>
    %23 = arith.addf %20, %22 : vector<2x8x4xf32>
    %24 = vector.shape_cast %23 : vector<2x8x4xf32> to vector<2x32xf32>
    %cst_16 = arith.constant dense<0.000000e+00> : vector<2x128xf32>
    %25 = tpu.matmul %24, %2, %cst_16 {dimension_numbers = #tpu.dot_dimension_numbers<[1], [0], [0], [1], [0, 0, 1, 1], [], []>} : vector<2x32xf32>, vector<32x128xf32>, vector<2x128xf32> -> vector<2x128xf32>
    %26 = vector.broadcast %5 : vector<1x128xf32> to vector<2x128xf32>
    %27 = arith.addf %25, %26 : vector<2x128xf32>
    %c0_17 = arith.constant 0 : index
    %c0_18 = arith.constant 0 : index
    %28 = vector.load %arg4[%c0_17, %c0_18] : memref<2x128xf32, #tpu.memory_space<vmem>>, vector<2x128xf32>
    tpu.vector_store %arg4[%c0_17, %c0_18], %27 {strides = array<i32>} : memref<2x128xf32, #tpu.memory_space<vmem>>, vector<2x128xf32>,
    return
  }
  func.func @transform_0(%arg0: i32) -> (i32, i32, i32) {
    %c0_i32 = arith.constant 0 : i32
    %c0_i32_0 = arith.constant 0 : i32
    %c0_i32_1 = arith.constant 0 : i32
    return %arg0, %c0_i32, %c0_i32_0 : i32, i32, i32
  }
  func.func @transform_1(%arg0: i32) -> (i32, i32, i32) {
    %c0_i32 = arith.constant 0 : i32
    %c0_i32_0 = arith.constant 0 : i32
    %c0_i32_1 = arith.constant 0 : i32
    return %arg0, %c0_i32, %c0_i32_0 : i32, i32, i32
  }
  func.func @transform_2(%arg0: i32) -> (i32, i32) {
    %c0_i32 = arith.constant 0 : i32
    %c0_i32_0 = arith.constant 0 : i32
    %c0_i32_1 = arith.constant 0 : i32
    return %c0_i32, %c0_i32_0 : i32, i32
  }
  func.func @transform_3(%arg0: i32) -> (i32, i32) {
    %c0_i32 = arith.constant 0 : i32
    %c0_i32_0 = arith.constant 0 : i32
    return %arg0, %c0_i32 : i32, i32
  }
}

</mosaic_0001>

<llo_original>
// kernel: tpu_custom_call.1
$region0: #{tpu_custom_call.1}
  #allocation0 [shape = 'u32[]', space=smem, size = 0x4, offset = 0x4, fixed_abs, tag = 'smem constant byte address 0x4 - core index']
  #allocation1 [shape = 'u32[144,128]{1,0:T(1,128)}', space=vmem, size = 0x12000, scoped, tag = 'internal scratch']
  %s0 = inlined_call_operand.hbm [shape: f32[2,8,16], index: 0, kind: input, shape index: {}]
  %s1 = inlined_call_operand.hbm [shape: f32[2,8,8], index: 1, kind: input, shape index: {}]
  %s2 = inlined_call_operand.hbm [shape: f32[88,128], index: 2, kind: input, shape index: {}]
  %s3 = inlined_call_operand.hbm [shape: f32[2,128], index: 3, kind: output, shape index: {}]
  %s4 = sld [smem:[#allocation0]]
  $region34: #{tpu_custom_call.1} parent=0
    _
  %s6 = ssub.s32 1, %s4
  %s7 = scalar_select 0, %s6, %s4
  $region1: #{tpu_custom_call.1} parent=0
    #allocation2 [shape = 'u8[8192]{0}', space=vmem, size = 0x2000, scoped, tag = 'input window, operand 0, single buffered']
    #allocation3 [shape = 's32[1]{0}', space=sflag, size = 0x4, scoped, tag = 'scoped memory for tpu_custom_call.1']
    #allocation4 [shape = 's32[1]{0}', space=sflag, size = 0x4, scoped, tag = 'scoped memory for tpu_custom_call.1']
    #allocation5 [shape = 'u8[8192]{0}', space=vmem, size = 0x2000, scoped, tag = 'input window, operand 1, single buffered']
    #allocation6 [shape = 's32[1]{0}', space=sflag, size = 0x4, scoped, tag = 'scoped memory for tpu_custom_call.1']
    #allocation7 [shape = 'u8[45056]{0}', space=vmem, size = 0xb000, scoped, tag = 'input window, operand 2, single buffered']
    #allocation8 [shape = 'u8[1024]{0}', space=vmem, size = 0x400, scoped, tag = 'output window, operand 0, single buffered']
    %8 = vsyncpa [#allocation3], 0
    %9 = vsyncpa [#allocation6], 0
    %10 = vsyncpa [#allocation4], 0
    // Predicated region
    $region2: #{tpu_custom_call.1} parent=1 // pred_check
      _
    $region3: #{tpu_custom_call.1} parent=1 // pred_check_branch
      %12 = sbr.rel (0) target = $region5
    $region4: #{tpu_custom_call.1} parent=1 // pred_region
      %s14 = ssub.s32 256, 256
      %15 = vsyncadd [#allocation3], %s14
      %s16 = sshll.u32 [#allocation2], 4
      %s17 = int_to_ptr.vmem [resolvable:$true] %s16
      %22 = dma.hbm_to_vmem [thread:$0]  %s0, 256, %s17, [#allocation3], 128, 128, 8
    $region5: #{tpu_custom_call.1} parent=1 // pred_fallthru
      _
    // Predicated region
    $region6: #{tpu_custom_call.1} parent=1 // pred_check
      _
    $region7: #{tpu_custom_call.1} parent=1 // pred_check_branch
      %24 = sbr.rel (0) target = $region9
    $region8: #{tpu_custom_call.1} parent=1 // pred_region
      %s26 = ssub.s32 256, 256
      %27 = vsyncadd [#allocation6], %s26
      %s28 = sshll.u32 [#allocation5], 4
      %s29 = int_to_ptr.vmem [resolvable:$true] %s28
      %34 = dma.hbm_to_vmem [thread:$0]  %s1, 256, %s29, [#allocation6], 128, 128, 8
    $region9: #{tpu_custom_call.1} parent=1 // pred_fallthru
      _
    // Predicated region
    $region10: #{tpu_custom_call.1} parent=1 // pred_check
      _
    $region11: #{tpu_custom_call.1} parent=1 // pred_check_branch
      %36 = sbr.rel (0) target = $region13
    $region12: #{tpu_custom_call.1} parent=1 // pred_region
      %s38 = ssub.s32 1408, 1408
      %39 = vsyncadd [#allocation6], %s38
      %s40 = sshll.u32 [#allocation7], 4
      %s41 = int_to_ptr.vmem [resolvable:$true] %s40
      %46 = dma.hbm_to_vmem [thread:$0]  %s2, 1408, %s41, [#allocation6], 128, 128, 8
    $region13: #{tpu_custom_call.1} parent=1 // pred_fallthru
      _
    // Predicated region
    $region14: #{tpu_custom_call.1} parent=1 // pred_check
      _
    $region15: #{tpu_custom_call.1} parent=1 // pred_check_branch
      %48 = sbr.rel (0) target = $region17
    $region16: #{tpu_custom_call.1} parent=1 // pred_region
      %49 = dma.done [#allocation3], 256
    $region17: #{tpu_custom_call.1} parent=1 // pred_fallthru
      _
    // Predicated region
    $region18: #{tpu_custom_call.1} parent=1 // pred_check
      _
    $region19: #{tpu_custom_call.1} parent=1 // pred_check_branch
      %51 = sbr.rel (0) target = $region21
    $region20: #{tpu_custom_call.1} parent=1 // pred_region
      %52 = dma.done [#allocation6], 256
    $region21: #{tpu_custom_call.1} parent=1 // pred_fallthru
      _
    // Predicated region
    $region22: #{tpu_custom_call.1} parent=1 // pred_check
      _
    $region23: #{tpu_custom_call.1} parent=1 // pred_check_branch
      %54 = sbr.rel (0) target = $region25
    $region24: #{tpu_custom_call.1} parent=1 // pred_region
      %55 = dma.done [#allocation6], 1408
    $region25: #{tpu_custom_call.1} parent=1 // pred_fallthru
      _
    %v56 = vld [vmem:[#allocation7 + $0x8] sm:$0xff]
    %v57 = vld [vmem:[#allocation7 + $0x10] sm:$0xff]
    %v58 = vld [vmem:[#allocation7 + $0x18] sm:$0xff]
    %v59 = vld [vmem:[#allocation7 + $0x20] sm:$0xff]
    %v60 = vld [vmem:[#allocation7 + $0x28] sm:$0xff]
    %v61 = vld [vmem:[#allocation7 + $0x30] sm:$0xff]
    %v62 = vld [vmem:[#allocation7 + $0x38] sm:$0xff]
    %v63 = vld [vmem:[#allocation7 + $0x40] sm:$0xff]
    %v64 = vld [vmem:[#allocation7 + $0x48] sm:$0xff]
    %v65 = vld [vmem:[#allocation7 + $0x50] sm:$0xff]
    %v66 = vld [vmem:[#allocation7] sm:$0x1]
    %v67 = vld [vmem:[#allocation7 + $0x1] sm:$0x1]
    %v68 = vld [vmem:[#allocation7 + $0x2] sm:$0x1]
    %v69 = vld [vmem:[#allocation5] sm:$0xff]
    %v70 = vld [vmem:[#allocation5 + $0x8] sm:$0xff]
    %v71 = vld [vmem:[#allocation2] sm:$0xff]
    %v72 = vld [vmem:[#allocation2 + $0x8] sm:$0xff]
    %vm73 = vcmask 130048
    %v75 = vsel %vm73, %v71, 0
    %v78 = vsel %vm73, %v72, 0
    %80 = vmatprep.subr.mxu0 0.0
    %81 = vmatpush1.msra.mxu0 %v56
    %82 = vmatprep.subr.mxu0 0.0
    %83 = vmatpush1.msra.mxu0 %v57
    %84 = vmatprep.subr.mxu0 0.0
    %85 = vmatpush1.msra.mxu0 0.0
    %86 = vmatprep.subr.mxu0 0.0
    %87 = vmatpush1.msra.mxu0 0.0
    %88 = vmatprep.subr.mxu0 0.0
    %89 = vmatpush1.msra.mxu0 0.0
    %90 = vmatprep.subr.mxu0 0.0
    %91 = vmatpush1.msra.mxu0 0.0
    %92 = vmatprep.subr.mxu0 0.0
    %93 = vmatpush1.msra.mxu0 0.0
    %94 = vmatprep.subr.mxu0 0.0
    %95 = vmatpush1.msra.mxu0 0.0
    %96 = vmatprep.subr.mxu0 0.0
    %97 = vmatpush1.msra.mxu0 0.0
    %98 = vmatprep.subr.mxu0 0.0
    %99 = vmatpush1.msra.mxu0 0.0
    %100 = vmatprep.subr.mxu0 0.0
    %101 = vmatpush1.msra.mxu0 0.0
    %102 = vmatprep.subr.mxu0 0.0
    %103 = vmatpush1.msra.mxu0 0.0
    %104 = vmatprep.subr.mxu0 0.0
    %105 = vmatpush1.msra.mxu0 0.0
    %106 = vmatprep.subr.mxu0 0.0
    %107 = vmatpush1.msra.mxu0 0.0
    %108 = vmatprep.subr.mxu0 0.0
    %109 = vmatpush1.msra.mxu0 0.0
    %110 = vmatprep.subr.mxu0 0.0
    %111 = vmatpush1.msra.mxu0 0.0
    %112 = vmatprep.subr.mxu0 0.0
    %113 = vmatpush1.msra.mxu0 0.0
    %114 = vmatprep.subr.mxu0 0.0
    %115 = vmatpush1.msra.mxu0 0.0
    %116 = vmatprep.subr.mxu0 0.0
    %117 = vmatpush1.msra.mxu0 0.0
    %118 = vmatprep.subr.mxu0 0.0
    %119 = vmatpush1.msra.mxu0 0.0
    %120 = vmatprep.subr.mxu0 0.0
    %121 = vmatpush1.msra.mxu0 0.0
    %122 = vmatprep.subr.mxu0 0.0
    %123 = vmatpush1.msra.mxu0 0.0
    %124 = vmatprep.subr.mxu0 0.0
    %125 = vmatpush1.msra.mxu0 0.0
    %126 = vmatprep.subr.mxu0 0.0
    %127 = vmatpush1.msra.mxu0 0.0
    %128 = vmatprep.subr.mxu0 0.0
    %129 = vmatpush1.msra.mxu0 0.0
    %130 = vmatprep.subr.mxu0 0.0
    %131 = vmatpush1.msra.mxu0 0.0
    %132 = vmatprep.subr.mxu0 0.0
    %133 = vmatpush1.msra.mxu0 0.0
    %134 = vmatprep.subr.mxu0 0.0
    %135 = vmatpush1.msra.mxu0 0.0
    %136 = vmatprep.subr.mxu0 0.0
    %137 = vmatpush1.msra.mxu0 0.0
    %138 = vmatprep.subr.mxu0 0.0
    %139 = vmatpush1.msra.mxu0 0.0
    %140 = vmatprep.subr.mxu0 0.0
    %141 = vmatpush1.msra.mxu0 0.0
    %142 = vmatprep.subr.mxu0 0.0
    %143 = vmatpush1.msra.mxu0 0.0
    %144 = vmatprep.mubr.f32.mxu0 0.0
    %145 = vmatmul.mubr.f32.gmra.mrb[0].mxu0 %v75
    %v146 = vpop.f32.mrb[0].mxu0
    %v147 = vadd.f32 0.0, %v146
    %v148 = vpop.f32.mrb[0].mxu0
    %149 = vmatprep.mubr.f32.mxu0 0.0
    %150 = vmatmul.mubr.f32.gmra.mrb[0].mxu0 %v78
    %v151 = vpop.f32.mrb[0].mxu0
    %v152 = vadd.f32 0.0, %v151
    %v153 = vpop.f32.mrb[0].mxu0
    %154 = vdwg.mxu0
    %v155 = vlaneseq
    %v156 = vshrl.u32 %v155, 7
    %v157 = vsub.s32 0, %v156
    %v158 = vrot.slane %v66, %v157
    %vm159 = vcmask 64512
    %v161 = vsel %vm159, %v69, 0
    %163 = vmatprep.subr.mxu0 0.0
    %164 = vmatpush1.msra.mxu0 %v147
    %165 = vmatprep.subr.mxu0 0.0
    %166 = vmatpush1.msra.mxu0 0.0
    %167 = vmatprep.subr.mxu0 0.0
    %168 = vmatpush1.msra.mxu0 0.0
    %169 = vmatprep.subr.mxu0 0.0
    %170 = vmatpush1.msra.mxu0 0.0
    %171 = vmatprep.subr.mxu0 0.0
    %172 = vmatpush1.msra.mxu0 0.0
    %173 = vmatprep.subr.mxu0 0.0
    %174 = vmatpush1.msra.mxu0 0.0
    %175 = vmatprep.subr.mxu0 0.0
    %176 = vmatpush1.msra.mxu0 0.0
    %177 = vmatprep.subr.mxu0 0.0
    %178 = vmatpush1.msra.mxu0 0.0
    %179 = vmatprep.subr.mxu0 0.0
    %180 = vmatpush1.msra.mxu0 0.0
    %181 = vmatprep.subr.mxu0 0.0
    %182 = vmatpush1.msra.mxu0 0.0
    %183 = vmatprep.subr.mxu0 0.0
    %184 = vmatpush1.msra.mxu0 0.0
    %185 = vmatprep.subr.mxu0 0.0
    %186 = vmatpush1.msra.mxu0 0.0
    %187 = vmatprep.subr.mxu0 0.0
    %188 = vmatpush1.msra.mxu0 0.0
    %189 = vmatprep.subr.mxu0 0.0
    %190 = vmatpush1.msra.mxu0 0.0
    %191 = vmatprep.subr.mxu0 0.0
    %192 = vmatpush1.msra.mxu0 0.0
    %193 = vmatprep.subr.mxu0 0.0
    %194 = vmatpush1.msra.mxu0 0.0
    %195 = vmatprep.subr.mxu0 0.0
    %196 = vmatpush1.msra.mxu0 0.0
    %197 = vmatprep.subr.mxu0 0.0
    %198 = vmatpush1.msra.mxu0 0.0
    %199 = vmatprep.subr.mxu0 0.0
    %200 = vmatpush1.msra.mxu0 0.0
    %201 = vmatprep.subr.mxu0 0.0
    %202 = vmatpush1.msra.mxu0 0.0
    %203 = vmatprep.subr.mxu0 0.0
    %204 = vmatpush1.msra.mxu0 0.0
    %205 = vmatprep.subr.mxu0 0.0
    %206 = vmatpush1.msra.mxu0 0.0
    %207 = vmatprep.subr.mxu0 0.0
    %208 = vmatpush1.msra.mxu0 0.0
    %209 = vmatprep.subr.mxu0 0.0
    %210 = vmatpush1.msra.mxu0 0.0
    %211 = vmatprep.subr.mxu0 0.0
    %212 = vmatpush1.msra.mxu0 0.0
    %213 = vmatprep.subr.mxu0 0.0
    %214 = vmatpush1.msra.mxu0 0.0
    %215 = vmatprep.subr.mxu0 0.0
    %216 = vmatpush1.msra.mxu0 0.0
    %217 = vmatprep.subr.mxu0 0.0
    %218 = vmatpush1.msra.mxu0 0.0
    %219 = vmatprep.subr.mxu0 0.0
    %220 = vmatpush1.msra.mxu0 0.0
    %221 = vmatprep.subr.mxu0 0.0
    %222 = vmatpush1.msra.mxu0 0.0
    %223 = vmatprep.subr.mxu0 0.0
    %224 = vmatpush1.msra.mxu0 0.0
    %225 = vmatprep.subr.mxu0 0.0
    %226 = vmatpush1.msra.mxu0 0.0
    %227 = vmatprep.mubr.f32.mxu0 0.0
    %228 = vmatmul.mubr.f32.gmra.mrb[0].mxu0 %v161
    %v229 = vpop.f32.mrb[0].mxu0
    %v230 = vadd.f32 %v158, %v229
    %v231 = vpop.f32.mrb[0].mxu0
    %232 = vdwg.mxu0
    %v234 = vsel %vm159, %v70, 0
    %236 = vmatprep.subr.mxu0 0.0
    %237 = vmatpush1.msra.mxu0 %v152
    %238 = vmatprep.subr.mxu0 0.0
    %239 = vmatpush1.msra.mxu0 0.0
    %240 = vmatprep.subr.mxu0 0.0
    %241 = vmatpush1.msra.mxu0 0.0
    %242 = vmatprep.subr.mxu0 0.0
    %243 = vmatpush1.msra.mxu0 0.0
    %244 = vmatprep.subr.mxu0 0.0
    %245 = vmatpush1.msra.mxu0 0.0
    %246 = vmatprep.subr.mxu0 0.0
    %247 = vmatpush1.msra.mxu0 0.0
    %248 = vmatprep.subr.mxu0 0.0
    %249 = vmatpush1.msra.mxu0 0.0
    %250 = vmatprep.subr.mxu0 0.0
    %251 = vmatpush1.msra.mxu0 0.0
    %252 = vmatprep.subr.mxu0 0.0
    %253 = vmatpush1.msra.mxu0 0.0
    %254 = vmatprep.subr.mxu0 0.0
    %255 = vmatpush1.msra.mxu0 0.0
    %256 = vmatprep.subr.mxu0 0.0
    %257 = vmatpush1.msra.mxu0 0.0
    %258 = vmatprep.subr.mxu0 0.0
    %259 = vmatpush1.msra.mxu0 0.0
    %260 = vmatprep.subr.mxu0 0.0
    %261 = vmatpush1.msra.mxu0 0.0
    %262 = vmatprep.subr.mxu0 0.0
    %263 = vmatpush1.msra.mxu0 0.0
    %264 = vmatprep.subr.mxu0 0.0
    %265 = vmatpush1.msra.mxu0 0.0
    %266 = vmatprep.subr.mxu0 0.0
    %267 = vmatpush1.msra.mxu0 0.0
    %268 = vmatprep.subr.mxu0 0.0
    %269 = vmatpush1.msra.mxu0 0.0
    %270 = vmatprep.subr.mxu0 0.0
    %271 = vmatpush1.msra.mxu0 0.0
    %272 = vmatprep.subr.mxu0 0.0
    %273 = vmatpush1.msra.mxu0 0.0
    %274 = vmatprep.subr.mxu0 0.0
    %275 = vmatpush1.msra.mxu0 0.0
    %276 = vmatprep.subr.mxu0 0.0
    %277 = vmatpush1.msra.mxu0 0.0
    %278 = vmatprep.subr.mxu0 0.0
    %279 = vmatpush1.msra.mxu0 0.0
    %280 = vmatprep.subr.mxu0 0.0
    %281 = vmatpush1.msra.mxu0 0.0
    %282 = vmatprep.subr.mxu0 0.0
    %283 = vmatpush1.msra.mxu0 0.0
    %284 = vmatprep.subr.mxu0 0.0
    %285 = vmatpush1.msra.mxu0 0.0
    %286 = vmatprep.subr.mxu0 0.0
    %287 = vmatpush1.msra.mxu0 0.0
    %288 = vmatprep.subr.mxu0 0.0
    %289 = vmatpush1.msra.mxu0 0.0
    %290 = vmatprep.subr.mxu0 0.0
    %291 = vmatpush1.msra.mxu0 0.0
    %292 = vmatprep.subr.mxu0 0.0
    %293 = vmatpush1.msra.mxu0 0.0
    %294 = vmatprep.subr.mxu0 0.0
    %295 = vmatpush1.msra.mxu0 0.0
    %296 = vmatprep.subr.mxu0 0.0
    %297 = vmatpush1.msra.mxu0 0.0
    %298 = vmatprep.subr.mxu0 0.0
    %299 = vmatpush1.msra.mxu0 0.0
    %300 = vmatprep.mubr.f32.mxu0 0.0
    %301 = vmatmul.mubr.f32.gmra.mrb[0].mxu0 %v234
    %v302 = vpop.f32.mrb[0].mxu0
    %v303 = vadd.f32 %v158, %v302
    %v304 = vpop.f32.mrb[0].mxu0
    %305 = vdwg.mxu0
    %v306 = vmax.f32 %v230, 0.0
    %v307 = vmax.f32 %v303, 0.0
    %vm308 = vcmask 261120
    %v310 = vsel %vm308, %v306, 0
    %v313 = vsel %vm308, %v307, 0
    %315 = vmatprep.subr.mxu0 0.0
    %316 = vmatpush1.msra.mxu0 %v58
    %317 = vmatprep.subr.mxu0 0.0
    %318 = vmatpush1.msra.mxu0 %v59
    %319 = vmatprep.subr.mxu0 0.0
    %320 = vmatpush1.msra.mxu0 %v60
    %321 = vmatprep.subr.mxu0 0.0
    %322 = vmatpush1.msra.mxu0 %v61
    %323 = vmatprep.subr.mxu0 0.0
    %324 = vmatpush1.msra.mxu0 0.0
    %325 = vmatprep.subr.mxu0 0.0
    %326 = vmatpush1.msra.mxu0 0.0
    %327 = vmatprep.subr.mxu0 0.0
    %328 = vmatpush1.msra.mxu0 0.0
    %329 = vmatprep.subr.mxu0 0.0
    %330 = vmatpush1.msra.mxu0 0.0
    %331 = vmatprep.subr.mxu0 0.0
    %332 = vmatpush1.msra.mxu0 0.0
    %333 = vmatprep.subr.mxu0 0.0
    %334 = vmatpush1.msra.mxu0 0.0
    %335 = vmatprep.subr.mxu0 0.0
    %336 = vmatpush1.msra.mxu0 0.0
    %337 = vmatprep.subr.mxu0 0.0
    %338 = vmatpush1.msra.mxu0 0.0
    %339 = vmatprep.subr.mxu0 0.0
    %340 = vmatpush1.msra.mxu0 0.0
    %341 = vmatprep.subr.mxu0 0.0
    %342 = vmatpush1.msra.mxu0 0.0
    %343 = vmatprep.subr.mxu0 0.0
    %344 = vmatpush1.msra.mxu0 0.0
    %345 = vmatprep.subr.mxu0 0.0
    %346 = vmatpush1.msra.mxu0 0.0
    %347 = vmatprep.subr.mxu0 0.0
    %348 = vmatpush1.msra.mxu0 0.0
    %349 = vmatprep.subr.mxu0 0.0
    %350 = vmatpush1.msra.mxu0 0.0
    %351 = vmatprep.subr.mxu0 0.0
    %352 = vmatpush1.msra.mxu0 0.0
    %353 = vmatprep.subr.mxu0 0.0
    %354 = vmatpush1.msra.mxu0 0.0
    %355 = vmatprep.subr.mxu0 0.0
    %356 = vmatpush1.msra.mxu0 0.0
    %357 = vmatprep.subr.mxu0 0.0
    %358 = vmatpush1.msra.mxu0 0.0
    %359 = vmatprep.subr.mxu0 0.0
    %360 = vmatpush1.msra.mxu0 0.0
    %361 = vmatprep.subr.mxu0 0.0
    %362 = vmatpush1.msra.mxu0 0.0
    %363 = vmatprep.subr.mxu0 0.0
    %364 = vmatpush1.msra.mxu0 0.0
    %365 = vmatprep.subr.mxu0 0.0
    %366 = vmatpush1.msra.mxu0 0.0
    %367 = vmatprep.subr.mxu0 0.0
    %368 = vmatpush1.msra.mxu0 0.0
    %369 = vmatprep.subr.mxu0 0.0
    %370 = vmatpush1.msra.mxu0 0.0
    %371 = vmatprep.subr.mxu0 0.0
    %372 = vmatpush1.msra.mxu0 0.0
    %373 = vmatprep.subr.mxu0 0.0
    %374 = vmatpush1.msra.mxu0 0.0
    %375 = vmatprep.subr.mxu0 0.0
    %376 = vmatpush1.msra.mxu0 0.0
    %377 = vmatprep.subr.mxu0 0.0
    %378 = vmatpush1.msra.mxu0 0.0
    %379 = vmatprep.mubr.f32.mxu0 0.0
    %380 = vmatmul.mubr.f32.gmra.mrb[0].mxu0 %v310
    %v381 = vpop.f32.mrb[0].mxu0
    %v382 = vadd.f32 0.0, %v381
    %v383 = vpop.f32.mrb[0].mxu0
    %384 = vmatprep.mubr.f32.mxu0 0.0
    %385 = vmatmul.mubr.f32.gmra.mrb[0].mxu0 %v313
    %v386 = vpop.f32.mrb[0].mxu0
    %v387 = vadd.f32 0.0, %v386
    %v388 = vpop.f32.mrb[0].mxu0
    %389 = vdwg.mxu0
    %v390 = vlaneseq
    %v391 = vshrl.u32 %v390, 7
    %v392 = vsub.s32 0, %v391
    %v393 = vrot.slane %v67, %v392
    %394 = vmatprep.subr.mxu0 0.0
    %395 = vmatpush1.msra.mxu0 %v382
    %396 = vmatprep.subr.mxu0 0.0
    %397 = vmatpush1.msra.mxu0 0.0
    %398 = vmatprep.subr.mxu0 0.0
    %399 = vmatpush1.msra.mxu0 0.0
    %400 = vmatprep.subr.mxu0 0.0
    %401 = vmatpush1.msra.mxu0 0.0
    %402 = vmatprep.subr.mxu0 0.0
    %403 = vmatpush1.msra.mxu0 0.0
    %404 = vmatprep.subr.mxu0 0.0
    %405 = vmatpush1.msra.mxu0 0.0
    %406 = vmatprep.subr.mxu0 0.0
    %407 = vmatpush1.msra.mxu0 0.0
    %408 = vmatprep.subr.mxu0 0.0
    %409 = vmatpush1.msra.mxu0 0.0
    %410 = vmatprep.subr.mxu0 0.0
    %411 = vmatpush1.msra.mxu0 0.0
    %412 = vmatprep.subr.mxu0 0.0
    %413 = vmatpush1.msra.mxu0 0.0
    %414 = vmatprep.subr.mxu0 0.0
    %415 = vmatpush1.msra.mxu0 0.0
    %416 = vmatprep.subr.mxu0 0.0
    %417 = vmatpush1.msra.mxu0 0.0
    %418 = vmatprep.subr.mxu0 0.0
    %419 = vmatpush1.msra.mxu0 0.0
    %420 = vmatprep.subr.mxu0 0.0
    %421 = vmatpush1.msra.mxu0 0.0
    %422 = vmatprep.subr.mxu0 0.0
    %423 = vmatpush1.msra.mxu0 0.0
    %424 = vmatprep.subr.mxu0 0.0
    %425 = vmatpush1.msra.mxu0 0.0
    %426 = vmatprep.subr.mxu0 0.0
    %427 = vmatpush1.msra.mxu0 0.0
    %428 = vmatprep.subr.mxu0 0.0
    %429 = vmatpush1.msra.mxu0 0.0
    %430 = vmatprep.subr.mxu0 0.0
    %431 = vmatpush1.msra.mxu0 0.0
    %432 = vmatprep.subr.mxu0 0.0
    %433 = vmatpush1.msra.mxu0 0.0
    %434 = vmatprep.subr.mxu0 0.0
    %435 = vmatpush1.msra.mxu0 0.0
    %436 = vmatprep.subr.mxu0 0.0
    %437 = vmatpush1.msra.mxu0 0.0
    %438 = vmatprep.subr.mxu0 0.0
    %439 = vmatpush1.msra.mxu0 0.0
    %440 = vmatprep.subr.mxu0 0.0
    %441 = vmatpush1.msra.mxu0 0.0
    %442 = vmatprep.subr.mxu0 0.0
    %443 = vmatpush1.msra.mxu0 0.0
    %444 = vmatprep.subr.mxu0 0.0
    %445 = vmatpush1.msra.mxu0 0.0
    %446 = vmatprep.subr.mxu0 0.0
    %447 = vmatpush1.msra.mxu0 0.0
    %448 = vmatprep.subr.mxu0 0.0
    %449 = vmatpush1.msra.mxu0 0.0
    %450 = vmatprep.subr.mxu0 0.0
    %451 = vmatpush1.msra.mxu0 0.0
    %452 = vmatprep.subr.mxu0 0.0
    %453 = vmatpush1.msra.mxu0 0.0
    %454 = vmatprep.subr.mxu0 0.0
    %455 = vmatpush1.msra.mxu0 0.0
    %456 = vmatprep.subr.mxu0 0.0
    %457 = vmatpush1.msra.mxu0 0.0
    %458 = vmatprep.mubr.f32.mxu0 0.0
    %459 = vmatmul.mubr.f32.gmra.mrb[0].mxu0 %v161
    %v460 = vpop.f32.mrb[0].mxu0
    %v461 = vadd.f32 %v393, %v460
    %v462 = vpop.f32.mrb[0].mxu0
    %463 = vdwg.mxu0
    %464 = vmatprep.subr.mxu0 0.0
    %465 = vmatpush1.msra.mxu0 %v387
    %466 = vmatprep.subr.mxu0 0.0
    %467 = vmatpush1.msra.mxu0 0.0
    %468 = vmatprep.subr.mxu0 0.0
    %469 = vmatpush1.msra.mxu0 0.0
    %470 = vmatprep.subr.mxu0 0.0
    %471 = vmatpush1.msra.mxu0 0.0
    %472 = vmatprep.subr.mxu0 0.0
    %473 = vmatpush1.msra.mxu0 0.0
    %474 = vmatprep.subr.mxu0 0.0
    %475 = vmatpush1.msra.mxu0 0.0
    %476 = vmatprep.subr.mxu0 0.0
    %477 = vmatpush1.msra.mxu0 0.0
    %478 = vmatprep.subr.mxu0 0.0
    %479 = vmatpush1.msra.mxu0 0.0
    %480 = vmatprep.subr.mxu0 0.0
    %481 = vmatpush1.msra.mxu0 0.0
    %482 = vmatprep.subr.mxu0 0.0
    %483 = vmatpush1.msra.mxu0 0.0
    %484 = vmatprep.subr.mxu0 0.0
    %485 = vmatpush1.msra.mxu0 0.0
    %486 = vmatprep.subr.mxu0 0.0
    %487 = vmatpush1.msra.mxu0 0.0
    %488 = vmatprep.subr.mxu0 0.0
    %489 = vmatpush1.msra.mxu0 0.0
    %490 = vmatprep.subr.mxu0 0.0
    %491 = vmatpush1.msra.mxu0 0.0
    %492 = vmatprep.subr.mxu0 0.0
    %493 = vmatpush1.msra.mxu0 0.0
    %494 = vmatprep.subr.mxu0 0.0
    %495 = vmatpush1.msra.mxu0 0.0
    %496 = vmatprep.subr.mxu0 0.0
    %497 = vmatpush1.msra.mxu0 0.0
    %498 = vmatprep.subr.mxu0 0.0
    %499 = vmatpush1.msra.mxu0 0.0
    %500 = vmatprep.subr.mxu0 0.0
    %501 = vmatpush1.msra.mxu0 0.0
    %502 = vmatprep.subr.mxu0 0.0
    %503 = vmatpush1.msra.mxu0 0.0
    %504 = vmatprep.subr.mxu0 0.0
    %505 = vmatpush1.msra.mxu0 0.0
    %506 = vmatprep.subr.mxu0 0.0
    %507 = vmatpush1.msra.mxu0 0.0
    %508 = vmatprep.subr.mxu0 0.0
    %509 = vmatpush1.msra.mxu0 0.0
    %510 = vmatprep.subr.mxu0 0.0
    %511 = vmatpush1.msra.mxu0 0.0
    %512 = vmatprep.subr.mxu0 0.0
    %513 = vmatpush1.msra.mxu0 0.0
    %514 = vmatprep.subr.mxu0 0.0
    %515 = vmatpush1.msra.mxu0 0.0
    %516 = vmatprep.subr.mxu0 0.0
    %517 = vmatpush1.msra.mxu0 0.0
    %518 = vmatprep.subr.mxu0 0.0
    %519 = vmatpush1.msra.mxu0 0.0
    %520 = vmatprep.subr.mxu0 0.0
    %521 = vmatpush1.msra.mxu0 0.0
    %522 = vmatprep.subr.mxu0 0.0
    %523 = vmatpush1.msra.mxu0 0.0
    %524 = vmatprep.subr.mxu0 0.0
    %525 = vmatpush1.msra.mxu0 0.0
    %526 = vmatprep.subr.mxu0 0.0
    %527 = vmatpush1.msra.mxu0 0.0
    %528 = vmatprep.mubr.f32.mxu0 0.0
    %529 = vmatmul.mubr.f32.gmra.mrb[0].mxu0 %v234
    %v530 = vpop.f32.mrb[0].mxu0
    %v531 = vadd.f32 %v393, %v530
    %v532 = vpop.f32.mrb[0].mxu0
    %533 = vdwg.mxu0
    %v534 = vcombine.high %v461, 0.0
    %v536 = vunpack.c.l.s4 1983009808
    %v537 = vunpack.c.0.s8 %v536
    %v538 = vlaneseq
    %v539 = vshrl.u32 %v538, 7
    %v540 = vsub.s32 %v537, %v539
    %v541 = vrot.slane %v461, %v540
    %v543 = vunpack.c.l.s4 1983009808
    %v544 = vunpack.c.0.s8 %v543
    %v545 = vlaneseq
    %v546 = vshrl.u32 %v545, 7
    %v547 = vsub.s32 %v544, %v546
    %v548 = vrot.slane %v534, %v547
    %v549 = vcombine.high %v531, 0.0
    %v551 = vunpack.c.l.s4 1983009808
    %v552 = vunpack.c.0.s8 %v551
    %v553 = vlaneseq
    %v554 = vshrl.u32 %v553, 7
    %v555 = vsub.s32 %v552, %v554
    %v556 = vrot.slane %v531, %v555
    %v558 = vunpack.c.l.s4 1983009808
    %v559 = vunpack.c.0.s8 %v558
    %v560 = vlaneseq
    %v561 = vshrl.u32 %v560, 7
    %v562 = vsub.s32 %v559, %v561
    %v563 = vrot.slane %v549, %v562
    %v564 = vcombine.low %v541, %v556
    %v565 = vcombine.high %v541, %v556
    %v567 = vunpack.c.l.s4 1934713408
    %v568 = vunpack.c.0.s8 %v567
    %v569 = vlaneseq
    %v570 = vshrl.u32 %v569, 7
    %v571 = vsub.s32 %v568, %v570
    %v572 = vrot.slane %v564, %v571
    %v574 = vunpack.c.l.s4 1934713408
    %v575 = vunpack.c.0.s8 %v574
    %v576 = vlaneseq
    %v577 = vshrl.u32 %v576, 7
    %v578 = vsub.s32 %v575, %v577
    %v579 = vrot.slane %v565, %v578
    %v580 = vcombine.low %v548, %v563
    %v581 = vcombine.high %v548, %v563
    %v583 = vunpack.c.l.s4 1934713408
    %v584 = vunpack.c.0.s8 %v583
    %v585 = vlaneseq
    %v586 = vshrl.u32 %v585, 7
    %v587 = vsub.s32 %v584, %v586
    %v588 = vrot.slane %v580, %v587
    %v590 = vunpack.c.l.s4 1934713408
    %v591 = vunpack.c.0.s8 %v590
    %v592 = vlaneseq
    %v593 = vshrl.u32 %v592, 7
    %v594 = vsub.s32 %v591, %v593
    %v595 = vrot.slane %v581, %v594
    %v596 = vcombine.high %v572, 0.0
    %v597 = vcombine.high %v579, 0.0
    %v598 = vcombine.high %v588, 0.0
    %v599 = vcombine.high %v595, 0.0
    %601 = vrot.lane.b32.xlu0 %v596, 4
    %v602 = vpop.permute.xlu0 %601
    %605 = vrot.lane.b32.xlu0 %v579, 8
    %v606 = vpop.permute.xlu0 %605
    %609 = vrot.lane.b32.xlu0 %v597, 12
    %v610 = vpop.permute.xlu0 %609
    %613 = vrot.lane.b32.xlu0 %v588, 16
    %v614 = vpop.permute.xlu0 %613
    %617 = vrot.lane.b32.xlu0 %v598, 20
    %v618 = vpop.permute.xlu0 %617
    %621 = vrot.lane.b32.xlu0 %v595, 24
    %v622 = vpop.permute.xlu0 %621
    %625 = vrot.lane.b32.xlu0 %v599, 28
    %v626 = vpop.permute.xlu0 %625
    %vm628 = vcmask 31744
    %v629 = vsel %vm628, %v572, %v602
    %v630 = vsel %vm159, %v629, %v606
    %vm631 = vcmask 97280
    %v632 = vsel %vm631, %v630, %v610
    %v633 = vsel %vm73, %v632, %v614
    %vm634 = vcmask 162816
    %v635 = vsel %vm634, %v633, %v618
    %vm636 = vcmask 195584
    %v637 = vsel %vm636, %v635, %v622
    %vm638 = vcmask 228352
    %v639 = vsel %vm638, %v637, %v626
    %v640 = vlaneseq
    %v641 = vshrl.u32 %v640, 7
    %v642 = vsub.s32 0, %v641
    %v643 = vrot.slane %v68, %v642
    %v645 = vsel %vm308, %v639, 0
    %647 = vmatprep.subr.mxu0 0.0
    %648 = vmatpush1.msra.mxu0 %v62
    %649 = vmatprep.subr.mxu0 0.0
    %650 = vmatpush1.msra.mxu0 %v63
    %651 = vmatprep.subr.mxu0 0.0
    %652 = vmatpush1.msra.mxu0 %v64
    %653 = vmatprep.subr.mxu0 0.0
    %654 = vmatpush1.msra.mxu0 %v65
    %655 = vmatprep.subr.mxu0 0.0
    %656 = vmatpush1.msra.mxu0 0.0
    %657 = vmatprep.subr.mxu0 0.0
    %658 = vmatpush1.msra.mxu0 0.0
    %659 = vmatprep.subr.mxu0 0.0
    %660 = vmatpush1.msra.mxu0 0.0
    %661 = vmatprep.subr.mxu0 0.0
    %662 = vmatpush1.msra.mxu0 0.0
    %663 = vmatprep.subr.mxu0 0.0
    %664 = vmatpush1.msra.mxu0 0.0
    %665 = vmatprep.subr.mxu0 0.0
    %666 = vmatpush1.msra.mxu0 0.0
    %667 = vmatprep.subr.mxu0 0.0
    %668 = vmatpush1.msra.mxu0 0.0
    %669 = vmatprep.subr.mxu0 0.0
    %670 = vmatpush1.msra.mxu0 0.0
    %671 = vmatprep.subr.mxu0 0.0
    %672 = vmatpush1.msra.mxu0 0.0
    %673 = vmatprep.subr.mxu0 0.0
    %674 = vmatpush1.msra.mxu0 0.0
    %675 = vmatprep.subr.mxu0 0.0
    %676 = vmatpush1.msra.mxu0 0.0
    %677 = vmatprep.subr.mxu0 0.0
    %678 = vmatpush1.msra.mxu0 0.0
    %679 = vmatprep.subr.mxu0 0.0
    %680 = vmatpush1.msra.mxu0 0.0
    %681 = vmatprep.subr.mxu0 0.0
    %682 = vmatpush1.msra.mxu0 0.0
    %683 = vmatprep.subr.mxu0 0.0
    %684 = vmatpush1.msra.mxu0 0.0
    %685 = vmatprep.subr.mxu0 0.0
    %686 = vmatpush1.msra.mxu0 0.0
    %687 = vmatprep.subr.mxu0 0.0
    %688 = vmatpush1.msra.mxu0 0.0
    %689 = vmatprep.subr.mxu0 0.0
    %690 = vmatpush1.msra.mxu0 0.0
    %691 = vmatprep.subr.mxu0 0.0
    %692 = vmatpush1.msra.mxu0 0.0
    %693 = vmatprep.subr.mxu0 0.0
    %694 = vmatpush1.msra.mxu0 0.0
    %695 = vmatprep.subr.mxu0 0.0
    %696 = vmatpush1.msra.mxu0 0.0
    %697 = vmatprep.subr.mxu0 0.0
    %698 = vmatpush1.msra.mxu0 0.0
    %699 = vmatprep.subr.mxu0 0.0
    %700 = vmatpush1.msra.mxu0 0.0
    %701 = vmatprep.subr.mxu0 0.0
    %702 = vmatpush1.msra.mxu0 0.0
    %703 = vmatprep.subr.mxu0 0.0
    %704 = vmatpush1.msra.mxu0 0.0
    %705 = vmatprep.subr.mxu0 0.0
    %706 = vmatpush1.msra.mxu0 0.0
    %707 = vmatprep.subr.mxu0 0.0
    %708 = vmatpush1.msra.mxu0 0.0
    %709 = vmatprep.subr.mxu0 0.0
    %710 = vmatpush1.msra.mxu0 0.0
    %711 = vmatprep.mubr.f32.mxu0 0.0
    %712 = vmatmul.mubr.f32.gmra.mrb[0].mxu0 %v645
    %v713 = vpop.f32.mrb[0].mxu0
    %v714 = vadd.f32 %v643, %v713
    %v715 = vpop.f32.mrb[0].mxu0
    %716 = vdwg.mxu0
    %717 = vst [vmem:[#allocation8] sm:$0x3] %v714
    // Predicated region
    $region26: #{tpu_custom_call.1} parent=1 // pred_check
      _
    $region27: #{tpu_custom_call.1} parent=1 // pred_check_branch
      %719 = sbr.rel (0) target = $region29
    $region28: #{tpu_custom_call.1} parent=1 // pred_region
      %s721 = ssub.s32 32, 32
      %722 = vsyncadd [#allocation4], %s721
      %s724 = sshll.u32 [#allocation8], 4
      %s725 = int_to_ptr.vmem [resolvable:$true] %s724
      %727 = dma.vmem_to_hbm [thread:$0]  %s725, 32, %s3, [#allocation4]
    $region29: #{tpu_custom_call.1} parent=1 // pred_fallthru
      _
    // Predicated region
    $region30: #{tpu_custom_call.1} parent=1 // pred_check
      _
    $region31: #{tpu_custom_call.1} parent=1 // pred_check_branch
      %729 = sbr.rel (0) target = $region33
    $region32: #{tpu_custom_call.1} parent=1 // pred_region
      %730 = dma.done [#allocation4], 32
    $region33: #{tpu_custom_call.1} parent=1 // pred_fallthru
      _
    %731 = vsyncpa [#allocation3], 1
    %732 = vsyncpa [#allocation6], 1
    %733 = vsyncpa [#allocation4], 1

</llo_original>
